<compile_context>
chip_gen: v6e
topology: v6e:2x2x1
jax: 0.10.0
libtpu: 0.0.40
codegen_flags: <defaults>
</compile_context>

<pallas_src>
import jax
import jax.numpy as jnp
import numpy as np
from jax.experimental import pallas as pl
from jax.experimental.pallas import tpu as pltpu

EPSILON = 0.05  # module default (learnable=False)

_LANE = 128
_SUBLANE_UNIT = {1: 32, 2: 16, 4: 8}      # min sublane tile per itemsize
_OUT_TILE_BYTES = 4 * 1024 * 1024         # per (double-buffered) output buffer
_MAX_ROW_TILE = 1024                      # bounds the lane-padded (tr, 1) input


# ---------------------------------------------------------------------------
# Main kernel: stream the (N, N) output through lane-dense tiles.
# out[r, c] = row_val[r] if row_val[r] >= 0 else sampled[c]   (one vsel + cast)
# ---------------------------------------------------------------------------
def _select_kernel(row_val_ref, sampled_ref, out_ref):
    rv = row_val_ref[...]        # (tr, 1) int32; -1 marks "explore" rows
    samp = sampled_ref[...]      # (1, tc) int32
    out_ref[...] = jnp.where(rv >= 0, rv, samp).astype(out_ref.dtype)


def _round_up(x, m):
    return ((x + m - 1) // m) * m


def _choose_tiles(n_rows, n_cols, itemsize):
    """Pick (tr, tc): lane-dense, byte-budgeted, >=2 grid steps when possible."""
    sub = _SUBLANE_UNIT[itemsize]
    # Columns: as wide as the budget allows (stores are the bottleneck).
    lane_cap = 4096 if itemsize <= 2 else 2048
    tc = n_cols if n_cols <= lane_cap else lane_cap
    # Rows: fill the byte budget, capped so the (tr, 1) row input stays small.
    tr_budget = max(sub, (_OUT_TILE_BYTES // (tc * itemsize)) // sub * sub)
    tr_budget = min(tr_budget, _MAX_ROW_TILE)
    tr = n_rows if n_rows <= tr_budget else tr_budget

    # Guarantee >= 2 parallel grid steps when possible (v7x has 2 TCs/chip).
    if pl.cdiv(n_rows, tr) * pl.cdiv(n_cols, tc) < 2:
        half_r = _round_up(pl.cdiv(n_rows, 2), sub)
        half_c = _round_up(pl.cdiv(n_cols, 2), _LANE)
        if half_r < n_rows:          # prefer row split: keeps stores lane-dense
            tr = half_r
        elif half_c < n_cols:
            tc = half_c
    return tr, tc


def epsilon_greedy(x, key, epsilon=EPSILON, out_dtype=None):
    n, m = x.shape
    if out_dtype is None:
        out_dtype = jnp.int8 if m <= 128 else (jnp.int16 if m <= 32768 else jnp.int32)
    out_dtype = np.dtype(out_dtype)

    # ---- rank-1 prologue: plain jnp (fused by XLA, no extra kernel launch) ----
    k_cat, k_b = jax.random.split(key)
    u_cat = jax.random.uniform(k_cat, (n,), dtype=jnp.float32)
    u_b = jax.random.uniform(k_b, (n,), dtype=jnp.float32)

    bests = jnp.argmax(x, axis=1).astype(jnp.int32)                    # (n,)
    explore = u_b >= jnp.float32(1.0 - float(epsilon))                 # b == 0
    row_val = jnp.where(explore, jnp.int32(-1), bests)[:, None]        # (n, 1)
    sampled = jnp.minimum(
        jnp.floor(u_cat * jnp.float32(m)).astype(jnp.int32),
        jnp.int32(m - 1))[None, :]                                     # (1, n)

    # ---- main: tiled, parallel, HBM-store-bound broadcast + select -----------
    tr, tc = _choose_tiles(n, n, out_dtype.itemsize)
    grid = (pl.cdiv(n, tr), pl.cdiv(n, tc))      # ragged edges masked by Pallas

    return pl.pallas_call(
        _select_kernel,
        out_shape=jax.ShapeDtypeStruct((n, n), out_dtype),
        grid=grid,
        in_specs=[
            pl.BlockSpec((tr, 1), lambda i, j: (i, 0)),   # fused bests/b row block
            pl.BlockSpec((1, tc), lambda i, j: (0, j)),   # sampled col block
        ],
        out_specs=pl.BlockSpec((tr, tc), lambda i, j: (i, j)),
        compiler_params=pltpu.CompilerParams(
            dimension_semantics=("parallel", "parallel"),
            vmem_limit_bytes=32 * 1024 * 1024),
    )(row_val, sampled)


# ---------------------------------------------------------------------------
# Pure-JAX reference (same explicit uniforms) for exact verification.
# ---------------------------------------------------------------------------
def _reference(x, key, epsilon=EPSILON):
    n, m = x.shape
    k_cat, k_b = jax.random.split(key)
    u_cat = jax.random.uniform(k_cat, (n,), dtype=jnp.float32)
    u_b = jax.random.uniform(k_b, (n,), dtype=jnp.float32)
    bests = jnp.argmax(x, axis=1).astype(jnp.int32)
    b = (u_b < jnp.float32(1.0 - float(epsilon))).astype(jnp.int32)
    sampled = jnp.minimum(jnp.floor(u_cat * jnp.float32(m)).astype(jnp.int32),
                          jnp.int32(m - 1))
    return jnp.where(b[:, None] != 0, bests[:, None], sampled[None, :])


if __name__ == "__main__":
    key = jax.random.PRNGKey(0)
    k_x, k_rng = jax.random.split(key)

    # Small shape consistent with the module's NxM q-value input.
    N, M = 8, 16
    q_values = jax.random.normal(k_x, (N, M), dtype=jnp.float32)

    actions = jax.block_until_ready(epsilon_greedy(q_values, k_rng))
    assert actions.shape == (N, N), actions.shape
    assert actions.dtype == jnp.int8, actions.dtype          # M=16 -> narrowed
    ref = _reference(q_values, k_rng)
    assert np.array_equal(np.asarray(actions, dtype=np.int32), np.asarray(ref))
    a = np.asarray(actions)
    assert np.all((a >= 0) & (a < M))

    # Second, non-aligned configuration: exercises the cdiv grid, masked ragged
    # edge blocks and the forced >=2-step parallel grid (both v7x TCs busy).
    N2, M2 = 1000, 7
    k_x2, k_r2 = jax.random.split(k_rng)
    q2 = jax.random.normal(k_x2, (N2, M2), dtype=jnp.float32)
    a2 = jax.block_until_ready(epsilon_greedy(q2, k_r2))
    assert a2.shape == (N2, N2) and a2.dtype == jnp.int8
    ref2 = _reference(q2, k_r2)
    assert np.array_equal(np.asarray(a2, dtype=np.int32), np.asarray(ref2))

    print("KERNEL_OK")
</pallas_src>

<mosaic_0001>
module attributes {stable_mosaic.version = 11 : i64} {
  func.func @_select_kernel(%arg0: i32, %arg1: i32, %arg2: memref<8x1xi32, #tpu.memory_space<vmem>>, %arg3: memref<1x8xi32, #tpu.memory_space<vmem>>, %arg4: memref<8x8xi8, #tpu.memory_space<vmem>>) attributes {dimension_semantics = [#tpu.dimension_semantics<parallel>, #tpu.dimension_semantics<parallel>], iteration_bounds = array<i64: 1, 1>, scalar_prefetch = 0 : i64, scratch_operands = 0 : i64, tpu.core_type = #tpu.core_type<tc>, window_params = [{transform_indices = @transform_0, window_bounds = array<i64: 8, 1>}, {transform_indices = @transform_1, window_bounds = array<i64: 1, 8>}, {transform_indices = @transform_2, window_bounds = array<i64: 8, 8>}]} {
    %c0 = arith.constant 0 : index
    %c0_0 = arith.constant 0 : index
    %0 = vector.load %arg2[%c0, %c0_0] : memref<8x1xi32, #tpu.memory_space<vmem>>, vector<8x1xi32>
    %c0_1 = arith.constant 0 : index
    %c0_2 = arith.constant 0 : index
    %1 = vector.load %arg3[%c0_1, %c0_2] : memref<1x8xi32, #tpu.memory_space<vmem>>, vector<1x8xi32>
    %c0_i32 = arith.constant 0 : i32
    %2 = vector.broadcast %c0_i32 : i32 to vector<8x1xi32>
    %3 = arith.cmpi sge, %0, %2 : vector<8x1xi32>
    %4 = vector.shape_cast %3 : vector<8x1xi1> to vector<8x1xi1>
    %5 = vector.broadcast %4 : vector<8x1xi1> to vector<8x8xi1>
    %6 = vector.shape_cast %0 : vector<8x1xi32> to vector<8x1xi32>
    %7 = vector.broadcast %6 : vector<8x1xi32> to vector<8x8xi32>
    %8 = vector.shape_cast %1 : vector<1x8xi32> to vector<1x8xi32>
    %9 = vector.broadcast %8 : vector<1x8xi32> to vector<8x8xi32>
    %10 = arith.select %5, %7, %9 : vector<8x8xi1>, vector<8x8xi32>
    %11 = arith.trunci %10 : vector<8x8xi32> to vector<8x8xi8>
    %c0_3 = arith.constant 0 : index
    %c0_4 = arith.constant 0 : index
    %12 = vector.load %arg4[%c0_3, %c0_4] : memref<8x8xi8, #tpu.memory_space<vmem>>, vector<8x8xi8>
    tpu.vector_store %arg4[%c0_3, %c0_4], %11 {strides = array<i32>} : memref<8x8xi8, #tpu.memory_space<vmem>>, vector<8x8xi8>,
    return
  }
  func.func @transform_0(%arg0: i32, %arg1: i32) -> (i32, i32) {
    %c0_i32 = arith.constant 0 : i32
    %c0_i32_0 = arith.constant 0 : i32
    return %arg0, %c0_i32 : i32, i32
  }
  func.func @transform_1(%arg0: i32, %arg1: i32) -> (i32, i32) {
    %c0_i32 = arith.constant 0 : i32
    %c0_i32_0 = arith.constant 0 : i32
    return %c0_i32, %arg1 : i32, i32
  }
  func.func @transform_2(%arg0: i32, %arg1: i32) -> (i32, i32) {
    %c0_i32 = arith.constant 0 : i32
    return %arg0, %arg1 : i32, i32
  }
}

</mosaic_0001>

<llo_original>
// kernel: tpu_custom_call.1
$region0: #{tpu_custom_call.1}
  #allocation0 [shape = 'u32[]', space=smem, size = 0x4, offset = 0x4, fixed_abs, tag = 'smem constant byte address 0x4 - core index']
  #allocation1 [shape = 'u32[144,128]{1,0:T(1,128)}', space=vmem, size = 0x12000, scoped, tag = 'internal scratch']
  %s0 = inlined_call_operand.vmem [shape: s32[8,1], index: 0, kind: input, shape index: {}]
  %s1 = inlined_call_operand.vmem [shape: s32[1,8], index: 1, kind: input, shape index: {}]
  %s2 = inlined_call_operand.hbm [shape: s8[8,8], index: 2, kind: output, shape index: {}]
  %s3 = sld [smem:[#allocation0]]
  $region18: #{tpu_custom_call.1} parent=0
    _
  %s5 = ssub.s32 1, %s3
  %s6 = scalar_select 0, %s5, %s3
  $region1: #{tpu_custom_call.1} parent=0
    #allocation2 [shape = 'u8[1024]{0}', space=vmem, size = 0x400, scoped, tag = 'output window, operand 0, single buffered']
    #allocation3 [shape = 's32[1]{0}', space=sflag, size = 0x4, scoped, tag = 'scoped memory for tpu_custom_call.1']
    %7 = vsyncpa [#allocation3], 0
    // Predicated region
    $region2: #{tpu_custom_call.1} parent=1 // pred_check
      _
    $region3: #{tpu_custom_call.1} parent=1 // pred_check_branch
      %9 = sbr.rel (0) target = $region5
    $region4: #{tpu_custom_call.1} parent=1 // pred_region
      _
    $region5: #{tpu_custom_call.1} parent=1 // pred_fallthru
      _
    // Predicated region
    $region6: #{tpu_custom_call.1} parent=1 // pred_check
      _
    $region7: #{tpu_custom_call.1} parent=1 // pred_check_branch
      %11 = sbr.rel (0) target = $region9
    $region8: #{tpu_custom_call.1} parent=1 // pred_region
      _
    $region9: #{tpu_custom_call.1} parent=1 // pred_fallthru
      _
    %v12 = vld [vmem:[%s0] sm:$0xff]
    %v13 = vld [vmem:[%s1] sm:$0x1]
    %vm14 = vcmp.ge.s32.totalorder %v12, 0
    %v15 = vsel %vm14, 1, 0
    %16 = vset.pattern.permute.xlu0 0
    %17 = vperm.xlu0 %16, %v15
    %v18 = vpop.permute.xlu0 %17
    %vm19 = vcmp.eq.s32.totalorder %v18, 1
    %20 = vset.pattern.permute.xlu0 0
    %21 = vperm.xlu0 %20, %v12
    %v22 = vpop.permute.xlu0 %21
    %v23 = vlaneseq
    %v24 = vshrl.u32 %v23, 7
    %v25 = vsub.s32 0, %v24
    %v26 = vrot.slane %v13, %v25
    %v27 = vsel %vm19, %v22, %v26
    %v28 = vpack.c.b16 %v27, %v27
    %v29 = vpack.c.b8 %v28, %v28
    %vm30 = vcmask 58368
    %31 = vst.msk [vmem:[#allocation2] sm:$0x3] %vm30, %v29
    // Predicated region
    $region10: #{tpu_custom_call.1} parent=1 // pred_check
      _
    $region11: #{tpu_custom_call.1} parent=1 // pred_check_branch
      %33 = sbr.rel (0) target = $region13
    $region12: #{tpu_custom_call.1} parent=1 // pred_region
      %s35 = ssub.s32 32, 32
      %36 = vsyncadd [#allocation3], %s35
      %s38 = sshll.u32 [#allocation2], 4
      %s39 = int_to_ptr.vmem [resolvable:$true] %s38
      %41 = dma.vmem_to_hbm [thread:$0]  %s39, 32, %s2, [#allocation3]
    $region13: #{tpu_custom_call.1} parent=1 // pred_fallthru
      _
    // Predicated region
    $region14: #{tpu_custom_call.1} parent=1 // pred_check
      _
    $region15: #{tpu_custom_call.1} parent=1 // pred_check_branch
      %43 = sbr.rel (0) target = $region17
    $region16: #{tpu_custom_call.1} parent=1 // pred_region
      %44 = dma.done [#allocation3], 32
    $region17: #{tpu_custom_call.1} parent=1 // pred_fallthru
      _
    %45 = vsyncpa [#allocation3], 1

</llo_original>
